<compile_context>
chip_gen: v7x
topology: tpu7x:2x2x1
jax: 0.10.0
libtpu: 0.0.40
codegen_flags: <defaults>
</compile_context>

<pallas_src>
import jax
import jax.numpy as jnp
from jax.experimental import pallas as pl
from jax.experimental.pallas import tpu as pltpu


def _round_up(x, m):
    return ((x + m - 1) // m) * m


# ---------------------------------------------------------------------------
# Single fused pass: packed conv-transpose matmul + BatchNorm (pre-folded
# scale/shift) + ELU, lane-dense (N, K*Cout) output.
# ---------------------------------------------------------------------------
def _conv_bn_elu_kernel(x_ref, w_ref, shift_ref, o_ref):
    # scale is folded into w_ref; z = (x @ W) * scale + shift == x @ Wscaled + shift
    z = jnp.dot(x_ref[...], w_ref[...],
                preferred_element_type=jnp.float32) + shift_ref[...]
    # ELU(alpha=1): exp only sees z<=0 (no overflow lane), single select.
    neg = jnp.exp(jnp.minimum(z, 0.0)) - 1.0
    o_ref[...] = jnp.where(z > 0, z, neg).astype(o_ref.dtype)


# ---------------------------------------------------------------------------
# Wrapper
# ---------------------------------------------------------------------------
class Upsample:
    """JAX/Pallas equivalent of the MinkowskiEngine Upsample block (norm='batch')."""

    def __init__(self, in_channels, out_channels, D=3, norm="batch", key=None,
                 tile_n=4096):
        assert norm == "batch", "only norm='batch' implemented"
        # TODO(synk): MinkowskiStableInstanceNorm (norm='instance') not implemented.
        self.D = D
        self.in_channels = in_channels
        self.out_channels = out_channels
        self.kernel_volume = 2 ** D          # kernel_size=2 per dimension
        self.tile_n = tile_n                 # N tile (multiple of 256)

        if key is None:
            key = jax.random.PRNGKey(0)
        fan_in = in_channels * self.kernel_volume
        bound = (6.0 / fan_in) ** 0.5
        # (K, Cin, Cout) weights, one matrix per kernel offset.
        self.weight = jax.random.uniform(
            key, (self.kernel_volume, in_channels, out_channels),
            minval=-bound, maxval=bound, dtype=jnp.float32)
        # Packed weight: W2d[cin, k*Cout + c] = weight[k, cin, c].
        self.weight2d = jnp.transpose(self.weight, (1, 0, 2)).reshape(
            in_channels, self.kernel_volume * out_channels)

        # BatchNorm affine params (PyTorch default init) + eps.
        self.gamma = jnp.ones((1, out_channels), jnp.float32)
        self.beta = jnp.zeros((1, out_channels), jnp.float32)
        self.eps = 1e-5

        # Kernel offsets {0,1}^D for output-coordinate generation.
        offs = jnp.stack(jnp.meshgrid(
            *([jnp.arange(2)] * D), indexing="ij"), axis=-1).reshape(-1, D)
        self.offsets = offs.astype(jnp.int32)          # (2^D, D)

    # ---- BN batch statistics from tiny closed-form sums (plain XLA) --------
    def _bn_scale_shift(self, feats):
        """Exact biased batch statistics over all K*N output points.

        Uses the centered formulation:
          var_c = (1/(K*N)) * [ sum_k W[k,:,c]^T Gc W[k,:,c]
                                + N * sum_k (mean_k[c] - mean[c])^2 ]
        with Gc the centered Cin x Cin Gram of X -- no E[y^2]-E[y]^2
        cancellation, no clamping needed.
        """
        N = feats.shape[0]
        K, Cout = self.kernel_volume, self.out_channels

        x_mean = jnp.mean(feats, axis=0)                       # (Cin,)
        xc = feats - x_mean                                    # (N, Cin)
        gram_c = xc.T @ xc                                     # (Cin, Cin)

        mean_k = jnp.einsum("c,kcd->kd", x_mean, self.weight)  # (K, Cout)
        mean = jnp.mean(mean_k, axis=0)                        # (Cout,)

        ss_within = jnp.einsum("kcd,ce,ked->d",
                               self.weight, gram_c, self.weight)      # (Cout,)
        ss_between = N * jnp.sum((mean_k - mean) ** 2, axis=0)         # (Cout,)
        var = (ss_within + ss_between) / float(K * N)

        scale = self.gamma[0] * jax.lax.rsqrt(var + self.eps)  # (Cout,)
        shift = self.beta[0] - mean * scale                    # (Cout,)
        return scale, shift

    def __call__(self, feats, coords):
        """feats: (N, Cin) f32;  coords: (N, 1+D) int32 (batch, x, y, z)."""
        N, Cin = feats.shape
        K, Cout, D = self.kernel_volume, self.out_channels, self.D
        Cpack = K * Cout

        # ---- BN scalars + scale folded into the packed weight (tiny math) --
        scale, shift = self._bn_scale_shift(feats)
        scale_p = jnp.tile(scale, K).reshape(1, Cpack)          # packed layout
        shift_p = jnp.tile(shift, K).reshape(1, Cpack)
        w2d_scaled = self.weight2d * scale_p                    # (Cin, Cpack)

        # ---- N tiling (multiple of 256; large tile amortizes grid overhead) -
        tn = min(self.tile_n, _round_up(N, 256))
        n_pad = _round_up(N, tn)
        # Zero-padded rows are computed and then sliced off; BN stats come
        # from the unpadded feats above, so padding cannot perturb them.
        feats_p = feats if n_pad == N else jnp.pad(feats, ((0, n_pad - N), (0, 0)))
        num_tiles = n_pad // tn

        fbytes = 4
        mm_flops = 2 * n_pad * Cin * Cpack

        # ---- fused conv-transpose + BN + ELU, lane-dense output ------------
        out_packed = pl.pallas_call(
            _conv_bn_elu_kernel,
            out_shape=jax.ShapeDtypeStruct((n_pad, Cpack), jnp.float32),
            grid_spec=pltpu.PrefetchScalarGridSpec(
                num_scalar_prefetch=0,
                grid=(num_tiles,),
                in_specs=[
                    pl.BlockSpec((tn, Cin), lambda t: (t, 0)),
                    pl.BlockSpec((Cin, Cpack), lambda t: (0, 0)),   # resident
                    pl.BlockSpec((1, Cpack), lambda t: (0, 0)),     # resident
                ],
                out_specs=pl.BlockSpec((tn, Cpack), lambda t: (t, 0)),
            ),
            compiler_params=pltpu.CompilerParams(
                dimension_semantics=("parallel",),          # megacore on v7x
                vmem_limit_bytes=32 << 20),                 # big tile legal on v5e
            cost_estimate=pl.CostEstimate(
                flops=mm_flops + 2 * n_pad * Cpack,
                transcendentals=n_pad * Cpack,
                bytes_accessed=fbytes * (n_pad * Cin + Cin * Cpack
                                         + Cpack + n_pad * Cpack)),
        )(feats_p, w2d_scaled, shift_p)

        # Packed layout (N, K*Cout) reshapes for free to (N*K, Cout):
        # out_feats[n*K + k, c] corresponds to kernel offset k of input point n.
        out_feats = out_packed[:N].reshape(N * K, Cout)

        # ---- output coordinates (integer glue, same (n, k) ordering) -------
        batch_col = jnp.broadcast_to(coords[:, None, :1], (N, K, 1))
        spatial = 2 * coords[:, None, 1:] + self.offsets[None, :, :]
        out_coords = jnp.concatenate([batch_col, spatial], axis=-1).reshape(
            N * K, 1 + D)
        return out_feats, out_coords


# ---------------------------------------------------------------------------
# Reference (plain JAX) for verification — same (n, k) output ordering.
# ---------------------------------------------------------------------------
def _reference(feats, weight, gamma, beta, eps):
    y = jnp.einsum("nc,kcd->nkd", feats, weight)      # (N, K, Cout)
    yf = y.reshape(-1, y.shape[-1])                   # (N*K, Cout)
    mean = yf.mean(axis=0)
    var = yf.var(axis=0)                              # biased
    z = (yf - mean) * jax.lax.rsqrt(var + eps) * gamma[0] + beta[0]
    return jnp.where(z > 0, z, jnp.expm1(z))


if __name__ == "__main__":
    key = jax.random.PRNGKey(0)
    k_feat, k_coord, k_w, k_feat2 = jax.random.split(key, 4)

    N, Cin, Cout, D = 64, 16, 32, 3
    feats = jax.random.normal(k_feat, (N, Cin), dtype=jnp.float32)
    coords = jax.random.randint(k_coord, (N, 1 + D), 0, 8, dtype=jnp.int32)
    coords = coords.at[:, 0].set(0)   # single batch in the sparse tensor

    block = Upsample(Cin, Cout, D=D, norm="batch", key=k_w)
    out_feats, out_coords = block(feats, coords)
    jax.block_until_ready(out_feats)
    jax.block_until_ready(out_coords)

    ref = _reference(feats, block.weight, block.gamma, block.beta, block.eps)
    assert out_feats.shape == (N * 2 ** D, Cout)
    assert out_coords.shape == (N * 2 ** D, 1 + D)
    assert jnp.allclose(out_feats, ref, atol=1e-4, rtol=1e-4)

    # Second check: multi-tile grid + row padding path (small explicit tile).
    N2 = 600
    feats2 = jax.random.normal(k_feat2, (N2, Cin), dtype=jnp.float32)
    coords2 = jnp.zeros((N2, 1 + D), jnp.int32)
    block2 = Upsample(Cin, Cout, D=D, norm="batch", key=k_w, tile_n=256)
    out_feats2, _ = block2(feats2, coords2)
    jax.block_until_ready(out_feats2)
    ref2 = _reference(feats2, block2.weight, block2.gamma, block2.beta, block2.eps)
    assert jnp.allclose(out_feats2, ref2, atol=1e-4, rtol=1e-4)

    print("KERNEL_OK")
</pallas_src>

<mosaic_0001>
module attributes {stable_mosaic.version = 11 : i64} {
  func.func @_conv_bn_elu_kernel(%arg0: i32, %arg1: memref<256x16xf32, #tpu.memory_space<vmem>>, %arg2: memref<16x256xf32, #tpu.memory_space<vmem>>, %arg3: memref<1x256xf32, #tpu.memory_space<vmem>>, %arg4: memref<256x256xf32, #tpu.memory_space<vmem>>) attributes {dimension_semantics = [#tpu.dimension_semantics<parallel>], iteration_bounds = array<i64: 1>, scalar_prefetch = 0 : i64, scratch_operands = 0 : i64, tpu.core_type = #tpu.core_type<tc>, window_params = [{transform_indices = @transform_0, window_bounds = array<i64: 256, 16>}, {pipeline_mode = #tpu.pipeline_mode<synchronous>, transform_indices = @transform_1, window_bounds = array<i64: 16, 256>}, {pipeline_mode = #tpu.pipeline_mode<synchronous>, transform_indices = @transform_2, window_bounds = array<i64: 1, 256>}, {transform_indices = @transform_3, window_bounds = array<i64: 256, 256>}]} {
    %c0 = arith.constant 0 : index
    %c0_0 = arith.constant 0 : index
    %0 = vector.load %arg1[%c0, %c0_0] : memref<256x16xf32, #tpu.memory_space<vmem>>, vector<256x16xf32>
    %c0_1 = arith.constant 0 : index
    %c0_2 = arith.constant 0 : index
    %1 = vector.load %arg2[%c0_1, %c0_2] : memref<16x256xf32, #tpu.memory_space<vmem>>, vector<16x256xf32>
    %cst = arith.constant dense<0.000000e+00> : vector<256x256xf32>
    %2 = tpu.matmul %0, %1, %cst {dimension_numbers = #tpu.dot_dimension_numbers<[1], [0], [0], [1], [0, 0, 1, 1], [], []>} : vector<256x16xf32>, vector<16x256xf32>, vector<256x256xf32> -> vector<256x256xf32>
    %c0_3 = arith.constant 0 : index
    %c0_4 = arith.constant 0 : index
    %3 = vector.load %arg3[%c0_3, %c0_4] : memref<1x256xf32, #tpu.memory_space<vmem>>, vector<1x256xf32>
    %4 = vector.broadcast %3 : vector<1x256xf32> to vector<256x256xf32>
    %5 = arith.addf %2, %4 : vector<256x256xf32>
    %cst_5 = arith.constant 0.000000e+00 : f32
    %6 = vector.broadcast %cst_5 : f32 to vector<256x256xf32>
    %7 = arith.minimumf %5, %6 : vector<256x256xf32>
    %8 = math.exp %7 : vector<256x256xf32>
    %cst_6 = arith.constant 1.000000e+00 : f32
    %9 = vector.broadcast %cst_6 : f32 to vector<256x256xf32>
    %10 = arith.subf %8, %9 : vector<256x256xf32>
    %cst_7 = arith.constant 0.000000e+00 : f32
    %11 = vector.broadcast %cst_7 : f32 to vector<256x256xf32>
    %12 = arith.cmpf ogt, %5, %11 : vector<256x256xf32>
    %13 = arith.select %12, %5, %10 : vector<256x256xi1>, vector<256x256xf32>
    %c0_8 = arith.constant 0 : index
    %c0_9 = arith.constant 0 : index
    %14 = vector.load %arg4[%c0_8, %c0_9] : memref<256x256xf32, #tpu.memory_space<vmem>>, vector<256x256xf32>
    tpu.vector_store %arg4[%c0_8, %c0_9], %13 {strides = array<i32>} : memref<256x256xf32, #tpu.memory_space<vmem>>, vector<256x256xf32>,
    return
  }
  func.func @transform_0(%arg0: i32) -> (i32, i32) {
    %c0_i32 = arith.constant 0 : i32
    %c0_i32_0 = arith.constant 0 : i32
    return %arg0, %c0_i32 : i32, i32
  }
  func.func @transform_1(%arg0: i32) -> (i32, i32) {
    %c0_i32 = arith.constant 0 : i32
    %c0_i32_0 = arith.constant 0 : i32
    %c0_i32_1 = arith.constant 0 : i32
    return %c0_i32, %c0_i32_0 : i32, i32
  }
  func.func @transform_2(%arg0: i32) -> (i32, i32) {
    %c0_i32 = arith.constant 0 : i32
    %c0_i32_0 = arith.constant 0 : i32
    %c0_i32_1 = arith.constant 0 : i32
    return %c0_i32, %c0_i32_0 : i32, i32
  }
  func.func @transform_3(%arg0: i32) -> (i32, i32) {
    %c0_i32 = arith.constant 0 : i32
    %c0_i32_0 = arith.constant 0 : i32
    return %arg0, %c0_i32 : i32, i32
  }
}

</mosaic_0001>

<llo_original>
// kernel: tpu_custom_call.1
$region0: #{tpu_custom_call.1}
  #allocation0 [shape = 'u32[]', space=smem, size = 0x4, offset = 0x4, fixed_abs, tag = 'smem constant byte address 0x4 - core index']
  #allocation1 [shape = 'u32[144,128]{1,0:T(1,128)}', space=vmem, size = 0x12000, scoped, tag = 'internal scratch']
  %s0 = inlined_call_operand.vmem [shape: f32[256,16], index: 0, kind: input, shape index: {}]
  %s1 = inlined_call_operand.vmem [shape: f32[16,256], index: 1, kind: input, shape index: {}]
  %s2 = inlined_call_operand.vmem [shape: f32[1,256], index: 2, kind: input, shape index: {}]
  %s3 = inlined_call_operand.hbm [shape: f32[256,256], index: 3, kind: output, shape index: {}]
  %s4 = sld [smem:[#allocation0]]
  $region22: #{tpu_custom_call.1} parent=0
    _
  %s6 = ssub.s32 1, %s4
  %s7 = scalar_select 0, %s6, %s4
  $region1: #{tpu_custom_call.1} parent=0
    #allocation2 [shape = 'u8[262144]{0}', space=vmem, size = 0x40000, scoped, tag = 'output window, operand 0, single buffered']
    #allocation3 [shape = 's32[1]{0}', space=sflag, size = 0x4, scoped, tag = 'scoped memory for tpu_custom_call.1']
    %8 = vsyncpa [#allocation3], 0
    // Predicated region
    $region2: #{tpu_custom_call.1} parent=1 // pred_check
      _
    $region3: #{tpu_custom_call.1} parent=1 // pred_check_branch
      %10 = sbr.rel (0) target = $region5
    $region4: #{tpu_custom_call.1} parent=1 // pred_region
      _
    $region5: #{tpu_custom_call.1} parent=1 // pred_fallthru
      _
    // Predicated region
    $region6: #{tpu_custom_call.1} parent=1 // pred_check
      _
    $region7: #{tpu_custom_call.1} parent=1 // pred_check_branch
      %12 = sbr.rel (0) target = $region9
    $region8: #{tpu_custom_call.1} parent=1 // pred_region
      _
    $region9: #{tpu_custom_call.1} parent=1 // pred_fallthru
      _
    // Predicated region
    $region10: #{tpu_custom_call.1} parent=1 // pred_check
      _
    $region11: #{tpu_custom_call.1} parent=1 // pred_check_branch
      %14 = sbr.rel (0) target = $region13
    $region12: #{tpu_custom_call.1} parent=1 // pred_region
      _
    $region13: #{tpu_custom_call.1} parent=1 // pred_fallthru
      _
    %v15 = vld [vmem:[%s0] sm:$0xff]
    %v16 = vld [vmem:[%s0 + $0x8] sm:$0xff]
    %v17 = vld [vmem:[%s0 + $0x10] sm:$0xff]
    %v18 = vld [vmem:[%s0 + $0x18] sm:$0xff]
    %v19 = vld [vmem:[%s0 + $0x20] sm:$0xff]
    %v20 = vld [vmem:[%s0 + $0x28] sm:$0xff]
    %v21 = vld [vmem:[%s0 + $0x30] sm:$0xff]
    %v22 = vld [vmem:[%s0 + $0x38] sm:$0xff]
    %v23 = vld [vmem:[%s0 + $0x40] sm:$0xff]
    %v24 = vld [vmem:[%s0 + $0x48] sm:$0xff]
    %v25 = vld [vmem:[%s0 + $0x50] sm:$0xff]
    %v26 = vld [vmem:[%s0 + $0x58] sm:$0xff]
    %v27 = vld [vmem:[%s0 + $0x60] sm:$0xff]
    %v28 = vld [vmem:[%s0 + $0x68] sm:$0xff]
    %v29 = vld [vmem:[%s0 + $0x70] sm:$0xff]
    %v30 = vld [vmem:[%s0 + $0x78] sm:$0xff]
    %v31 = vld [vmem:[%s0 + $0x80] sm:$0xff]
    %v32 = vld [vmem:[%s0 + $0x88] sm:$0xff]
    %v33 = vld [vmem:[%s0 + $0x90] sm:$0xff]
    %v34 = vld [vmem:[%s0 + $0x98] sm:$0xff]
    %v35 = vld [vmem:[%s0 + $0xa0] sm:$0xff]
    %v36 = vld [vmem:[%s0 + $0xa8] sm:$0xff]
    %v37 = vld [vmem:[%s0 + $0xb0] sm:$0xff]
    %v38 = vld [vmem:[%s0 + $0xb8] sm:$0xff]
    %v39 = vld [vmem:[%s0 + $0xc0] sm:$0xff]
    %v40 = vld [vmem:[%s0 + $0xc8] sm:$0xff]
    %v41 = vld [vmem:[%s0 + $0xd0] sm:$0xff]
    %v42 = vld [vmem:[%s0 + $0xd8] sm:$0xff]
    %v43 = vld [vmem:[%s0 + $0xe0] sm:$0xff]
    %v44 = vld [vmem:[%s0 + $0xe8] sm:$0xff]
    %v45 = vld [vmem:[%s0 + $0xf0] sm:$0xff]
    %v46 = vld [vmem:[%s0 + $0xf8] sm:$0xff]
    %v47 = vld [vmem:[%s1] sm:$0xff]
    %v48 = vld [vmem:[%s1 + $0x8] sm:$0xff]
    %v49 = vld [vmem:[%s1 + $0x10] sm:$0xff]
    %v50 = vld [vmem:[%s1 + $0x18] sm:$0xff]
    %v51 = vld [vmem:[%s2] sm:$0x3]
    %v53 = vlaneseq
    %v54 = vshrl.u32 %v53, 7
    %v55 = vsub.s32 0, %v54
    %v56 = vrot.slane %v51, %v55
    %v57 = vlaneseq
    %v58 = vshrl.u32 %v57, 7
    %v59 = vsub.s32 1, %v58
    %v60 = vrot.slane %v51, %v59
    %vm63 = vcmask 130048
    %v65 = vsel %vm63, %v15, 0
    %v68 = vsel %vm63, %v16, 0
    %v71 = vsel %vm63, %v17, 0
    %v74 = vsel %vm63, %v18, 0
    %v77 = vsel %vm63, %v19, 0
    %v80 = vsel %vm63, %v20, 0
    %v83 = vsel %vm63, %v21, 0
    %v86 = vsel %vm63, %v22, 0
    %v89 = vsel %vm63, %v23, 0
    %v92 = vsel %vm63, %v24, 0
    %v95 = vsel %vm63, %v25, 0
    %v98 = vsel %vm63, %v26, 0
    %v101 = vsel %vm63, %v27, 0
    %v104 = vsel %vm63, %v28, 0
    %v107 = vsel %vm63, %v29, 0
    %v110 = vsel %vm63, %v30, 0
    %v113 = vsel %vm63, %v31, 0
    %v116 = vsel %vm63, %v32, 0
    %v119 = vsel %vm63, %v33, 0
    %v122 = vsel %vm63, %v34, 0
    %v125 = vsel %vm63, %v35, 0
    %v128 = vsel %vm63, %v36, 0
    %v131 = vsel %vm63, %v37, 0
    %v134 = vsel %vm63, %v38, 0
    %v137 = vsel %vm63, %v39, 0
    %v140 = vsel %vm63, %v40, 0
    %v143 = vsel %vm63, %v41, 0
    %v146 = vsel %vm63, %v42, 0
    %v149 = vsel %vm63, %v43, 0
    %v152 = vsel %vm63, %v44, 0
    %v155 = vsel %vm63, %v45, 0
    %v158 = vsel %vm63, %v46, 0
    %160 = vmatprep.subr.mxu0 %v48
    %161 = vmatpush1.msra.mxu0 %v47
    %162 = vmatprep.subr.mxu0 %v50
    %163 = vmatpush1.msra.mxu0 %v49
    %164 = vmatprep.subr.mxu0 0.0
    %165 = vmatpush1.msra.mxu0 0.0
    %166 = vmatprep.subr.mxu0 0.0
    %167 = vmatpush1.msra.mxu0 0.0
    %168 = vmatprep.subr.mxu0 0.0
    %169 = vmatpush1.msra.mxu0 0.0
    %170 = vmatprep.subr.mxu0 0.0
    %171 = vmatpush1.msra.mxu0 0.0
    %172 = vmatprep.subr.mxu0 0.0
    %173 = vmatpush1.msra.mxu0 0.0
    %174 = vmatprep.subr.mxu0 0.0
    %175 = vmatpush1.msra.mxu0 0.0
    %176 = vmatprep.subr.mxu0 0.0
    %177 = vmatpush1.msra.mxu0 0.0
    %178 = vmatprep.subr.mxu0 0.0
    %179 = vmatpush1.msra.mxu0 0.0
    %180 = vmatprep.subr.mxu0 0.0
    %181 = vmatpush1.msra.mxu0 0.0
    %182 = vmatprep.subr.mxu0 0.0
    %183 = vmatpush1.msra.mxu0 0.0
    %184 = vmatprep.subr.mxu0 0.0
    %185 = vmatpush1.msra.mxu0 0.0
    %186 = vmatprep.subr.mxu0 0.0
    %187 = vmatpush1.msra.mxu0 0.0
    %188 = vmatprep.subr.mxu0 0.0
    %189 = vmatpush1.msra.mxu0 0.0
    %190 = vmatprep.subr.mxu0 0.0
    %191 = vmatpush1.msra.mxu0 0.0
    %192 = vmatprep.subr.mxu0 0.0
    %193 = vmatpush1.msra.mxu0 0.0
    %194 = vmatprep.subr.mxu0 0.0
    %195 = vmatpush1.msra.mxu0 0.0
    %196 = vmatprep.subr.mxu0 0.0
    %197 = vmatpush1.msra.mxu0 0.0
    %198 = vmatprep.subr.mxu0 0.0
    %199 = vmatpush1.msra.mxu0 0.0
    %200 = vmatprep.subr.mxu0 0.0
    %201 = vmatpush1.msra.mxu0 0.0
    %202 = vmatprep.subr.mxu0 0.0
    %203 = vmatpush1.msra.mxu0 0.0
    %204 = vmatprep.subr.mxu0 0.0
    %205 = vmatpush1.msra.mxu0 0.0
    %206 = vmatprep.subr.mxu0 0.0
    %207 = vmatpush1.msra.mxu0 0.0
    %208 = vmatprep.subr.mxu0 0.0
    %209 = vmatpush1.msra.mxu0 0.0
    %210 = vmatprep.subr.mxu0 0.0
    %211 = vmatpush1.msra.mxu0 0.0
    %212 = vmatprep.subr.mxu0 0.0
    %213 = vmatpush1.msra.mxu0 0.0
    %214 = vmatprep.subr.mxu0 0.0
    %215 = vmatpush1.msra.mxu0 0.0
    %216 = vmatprep.subr.mxu0 0.0
    %217 = vmatpush1.msra.mxu0 0.0
    %218 = vmatprep.subr.mxu0 0.0
    %219 = vmatpush1.msra.mxu0 0.0
    %220 = vmatprep.subr.mxu0 0.0
    %221 = vmatpush1.msra.mxu0 0.0
    %222 = vmatprep.subr.mxu0 0.0
    %223 = vmatpush1.msra.mxu0 0.0
    %224 = vmatprep.mubr.f32.mxu0 0.0
    %225 = vmatmul.mubr.f32.gmra.mrb[0].mxu0 %v65
    %v226 = vpop.f32.mrb[0].mxu0
    %v227 = vadd.f32 %v56, %v226
    %v228 = vpop.f32.mrb[0].mxu0
    %v229 = vadd.f32 %v60, %v228
    %230 = vmatprep.mubr.f32.mxu0 0.0
    %231 = vmatmul.mubr.f32.gmra.mrb[0].mxu0 %v68
    %v232 = vpop.f32.mrb[0].mxu0
    %v233 = vadd.f32 %v56, %v232
    %v234 = vpop.f32.mrb[0].mxu0
    %v235 = vadd.f32 %v60, %v234
    %236 = vmatprep.mubr.f32.mxu0 0.0
    %237 = vmatmul.mubr.f32.gmra.mrb[0].mxu0 %v71
    %v238 = vpop.f32.mrb[0].mxu0
    %v239 = vadd.f32 %v56, %v238
    %v240 = vpop.f32.mrb[0].mxu0
    %v241 = vadd.f32 %v60, %v240
    %242 = vmatprep.mubr.f32.mxu0 0.0
    %243 = vmatmul.mubr.f32.gmra.mrb[0].mxu0 %v74
    %v244 = vpop.f32.mrb[0].mxu0
    %v245 = vadd.f32 %v56, %v244
    %v246 = vpop.f32.mrb[0].mxu0
    %v247 = vadd.f32 %v60, %v246
    %248 = vmatprep.mubr.f32.mxu0 0.0
    %249 = vmatmul.mubr.f32.gmra.mrb[0].mxu0 %v77
    %v250 = vpop.f32.mrb[0].mxu0
    %v251 = vadd.f32 %v56, %v250
    %v252 = vpop.f32.mrb[0].mxu0
    %v253 = vadd.f32 %v60, %v252
    %254 = vmatprep.mubr.f32.mxu0 0.0
    %255 = vmatmul.mubr.f32.gmra.mrb[0].mxu0 %v80
    %v256 = vpop.f32.mrb[0].mxu0
    %v257 = vadd.f32 %v56, %v256
    %v258 = vpop.f32.mrb[0].mxu0
    %v259 = vadd.f32 %v60, %v258
    %260 = vmatprep.mubr.f32.mxu0 0.0
    %261 = vmatmul.mubr.f32.gmra.mrb[0].mxu0 %v83
    %v262 = vpop.f32.mrb[0].mxu0
    %v263 = vadd.f32 %v56, %v262
    %v264 = vpop.f32.mrb[0].mxu0
    %v265 = vadd.f32 %v60, %v264
    %266 = vmatprep.mubr.f32.mxu0 0.0
    %267 = vmatmul.mubr.f32.gmra.mrb[0].mxu0 %v86
    %v268 = vpop.f32.mrb[0].mxu0
    %v269 = vadd.f32 %v56, %v268
    %v270 = vpop.f32.mrb[0].mxu0
    %v271 = vadd.f32 %v60, %v270
    %272 = vmatprep.mubr.f32.mxu0 0.0
    %273 = vmatmul.mubr.f32.gmra.mrb[0].mxu0 %v89
    %v274 = vpop.f32.mrb[0].mxu0
    %v275 = vadd.f32 %v56, %v274
    %v276 = vpop.f32.mrb[0].mxu0
    %v277 = vadd.f32 %v60, %v276
    %278 = vmatprep.mubr.f32.mxu0 0.0
    %279 = vmatmul.mubr.f32.gmra.mrb[0].mxu0 %v92
    %v280 = vpop.f32.mrb[0].mxu0
    %v281 = vadd.f32 %v56, %v280
    %v282 = vpop.f32.mrb[0].mxu0
    %v283 = vadd.f32 %v60, %v282
    %284 = vmatprep.mubr.f32.mxu0 0.0
    %285 = vmatmul.mubr.f32.gmra.mrb[0].mxu0 %v95
    %v286 = vpop.f32.mrb[0].mxu0
    %v287 = vadd.f32 %v56, %v286
    %v288 = vpop.f32.mrb[0].mxu0
    %v289 = vadd.f32 %v60, %v288
    %290 = vmatprep.mubr.f32.mxu0 0.0
    %291 = vmatmul.mubr.f32.gmra.mrb[0].mxu0 %v98
    %v292 = vpop.f32.mrb[0].mxu0
    %v293 = vadd.f32 %v56, %v292
    %v294 = vpop.f32.mrb[0].mxu0
    %v295 = vadd.f32 %v60, %v294
    %296 = vmatprep.mubr.f32.mxu0 0.0
    %297 = vmatmul.mubr.f32.gmra.mrb[0].mxu0 %v101
    %v298 = vpop.f32.mrb[0].mxu0
    %v299 = vadd.f32 %v56, %v298
    %v300 = vpop.f32.mrb[0].mxu0
    %v301 = vadd.f32 %v60, %v300
    %302 = vmatprep.mubr.f32.mxu0 0.0
    %303 = vmatmul.mubr.f32.gmra.mrb[0].mxu0 %v104
    %v304 = vpop.f32.mrb[0].mxu0
    %v305 = vadd.f32 %v56, %v304
    %v306 = vpop.f32.mrb[0].mxu0
    %v307 = vadd.f32 %v60, %v306
    %308 = vmatprep.mubr.f32.mxu0 0.0
    %309 = vmatmul.mubr.f32.gmra.mrb[0].mxu0 %v107
    %v310 = vpop.f32.mrb[0].mxu0
    %v311 = vadd.f32 %v56, %v310
    %v312 = vpop.f32.mrb[0].mxu0
    %v313 = vadd.f32 %v60, %v312
    %314 = vmatprep.mubr.f32.mxu0 0.0
    %315 = vmatmul.mubr.f32.gmra.mrb[0].mxu0 %v110
    %v316 = vpop.f32.mrb[0].mxu0
    %v317 = vadd.f32 %v56, %v316
    %v318 = vpop.f32.mrb[0].mxu0
    %v319 = vadd.f32 %v60, %v318
    %320 = vmatprep.mubr.f32.mxu0 0.0
    %321 = vmatmul.mubr.f32.gmra.mrb[0].mxu0 %v113
    %v322 = vpop.f32.mrb[0].mxu0
    %v323 = vadd.f32 %v56, %v322
    %v324 = vpop.f32.mrb[0].mxu0
    %v325 = vadd.f32 %v60, %v324
    %326 = vmatprep.mubr.f32.mxu0 0.0
    %327 = vmatmul.mubr.f32.gmra.mrb[0].mxu0 %v116
    %v328 = vpop.f32.mrb[0].mxu0
    %v329 = vadd.f32 %v56, %v328
    %v330 = vpop.f32.mrb[0].mxu0
    %v331 = vadd.f32 %v60, %v330
    %332 = vmatprep.mubr.f32.mxu0 0.0
    %333 = vmatmul.mubr.f32.gmra.mrb[0].mxu0 %v119
    %v334 = vpop.f32.mrb[0].mxu0
    %v335 = vadd.f32 %v56, %v334
    %v336 = vpop.f32.mrb[0].mxu0
    %v337 = vadd.f32 %v60, %v336
    %338 = vmatprep.mubr.f32.mxu0 0.0
    %339 = vmatmul.mubr.f32.gmra.mrb[0].mxu0 %v122
    %v340 = vpop.f32.mrb[0].mxu0
    %v341 = vadd.f32 %v56, %v340
    %v342 = vpop.f32.mrb[0].mxu0
    %v343 = vadd.f32 %v60, %v342
    %344 = vmatprep.mubr.f32.mxu0 0.0
    %345 = vmatmul.mubr.f32.gmra.mrb[0].mxu0 %v125
    %v346 = vpop.f32.mrb[0].mxu0
    %v347 = vadd.f32 %v56, %v346
    %v348 = vpop.f32.mrb[0].mxu0
    %v349 = vadd.f32 %v60, %v348
    %350 = vmatprep.mubr.f32.mxu0 0.0
    %351 = vmatmul.mubr.f32.gmra.mrb[0].mxu0 %v128
    %v352 = vpop.f32.mrb[0].mxu0
    %v353 = vadd.f32 %v56, %v352
    %v354 = vpop.f32.mrb[0].mxu0
    %v355 = vadd.f32 %v60, %v354
    %356 = vmatprep.mubr.f32.mxu0 0.0
    %357 = vmatmul.mubr.f32.gmra.mrb[0].mxu0 %v131
    %v358 = vpop.f32.mrb[0].mxu0
    %v359 = vadd.f32 %v56, %v358
    %v360 = vpop.f32.mrb[0].mxu0
    %v361 = vadd.f32 %v60, %v360
    %362 = vmatprep.mubr.f32.mxu0 0.0
    %363 = vmatmul.mubr.f32.gmra.mrb[0].mxu0 %v134
    %v364 = vpop.f32.mrb[0].mxu0
    %v365 = vadd.f32 %v56, %v364
    %v366 = vpop.f32.mrb[0].mxu0
    %v367 = vadd.f32 %v60, %v366
    %368 = vmatprep.mubr.f32.mxu0 0.0
    %369 = vmatmul.mubr.f32.gmra.mrb[0].mxu0 %v137
    %v370 = vpop.f32.mrb[0].mxu0
    %v371 = vadd.f32 %v56, %v370
    %v372 = vpop.f32.mrb[0].mxu0
    %v373 = vadd.f32 %v60, %v372
    %374 = vmatprep.mubr.f32.mxu0 0.0
    %375 = vmatmul.mubr.f32.gmra.mrb[0].mxu0 %v140
    %v376 = vpop.f32.mrb[0].mxu0
    %v377 = vadd.f32 %v56, %v376
    %v378 = vpop.f32.mrb[0].mxu0
    %v379 = vadd.f32 %v60, %v378
    %380 = vmatprep.mubr.f32.mxu0 0.0
    %381 = vmatmul.mubr.f32.gmra.mrb[0].mxu0 %v143
    %v382 = vpop.f32.mrb[0].mxu0
    %v383 = vadd.f32 %v56, %v382
    %v384 = vpop.f32.mrb[0].mxu0
    %v385 = vadd.f32 %v60, %v384
    %386 = vmatprep.mubr.f32.mxu0 0.0
    %387 = vmatmul.mubr.f32.gmra.mrb[0].mxu0 %v146
    %v388 = vpop.f32.mrb[0].mxu0
    %v389 = vadd.f32 %v56, %v388
    %v390 = vpop.f32.mrb[0].mxu0
    %v391 = vadd.f32 %v60, %v390
    %392 = vmatprep.mubr.f32.mxu0 0.0
    %393 = vmatmul.mubr.f32.gmra.mrb[0].mxu0 %v149
    %v394 = vpop.f32.mrb[0].mxu0
    %v395 = vadd.f32 %v56, %v394
    %v396 = vpop.f32.mrb[0].mxu0
    %v397 = vadd.f32 %v60, %v396
    %398 = vmatprep.mubr.f32.mxu0 0.0
    %399 = vmatmul.mubr.f32.gmra.mrb[0].mxu0 %v152
    %v400 = vpop.f32.mrb[0].mxu0
    %v401 = vadd.f32 %v56, %v400
    %v402 = vpop.f32.mrb[0].mxu0
    %v403 = vadd.f32 %v60, %v402
    %404 = vmatprep.mubr.f32.mxu0 0.0
    %405 = vmatmul.mubr.f32.gmra.mrb[0].mxu0 %v155
    %v406 = vpop.f32.mrb[0].mxu0
    %v407 = vadd.f32 %v56, %v406
    %v408 = vpop.f32.mrb[0].mxu0
    %v409 = vadd.f32 %v60, %v408
    %410 = vmatprep.mubr.f32.mxu0 0.0
    %411 = vmatmul.mubr.f32.gmra.mrb[0].mxu0 %v158
    %v412 = vpop.f32.mrb[0].mxu0
    %v413 = vadd.f32 %v56, %v412
    %v414 = vpop.f32.mrb[0].mxu0
    %v415 = vadd.f32 %v60, %v414
    %416 = vdwg.mxu0
    %v417 = vmin.f32 %v227, 0.0
    %v418 = vmin.f32 %v229, 0.0
    %v419 = vmin.f32 %v233, 0.0
    %v420 = vmin.f32 %v235, 0.0
    %v421 = vmin.f32 %v239, 0.0
    %v422 = vmin.f32 %v241, 0.0
    %v423 = vmin.f32 %v245, 0.0
    %v424 = vmin.f32 %v247, 0.0
    %v425 = vmin.f32 %v251, 0.0
    %v426 = vmin.f32 %v253, 0.0
    %v427 = vmin.f32 %v257, 0.0
    %v428 = vmin.f32 %v259, 0.0
    %v429 = vmin.f32 %v263, 0.0
    %v430 = vmin.f32 %v265, 0.0
    %v431 = vmin.f32 %v269, 0.0
    %v432 = vmin.f32 %v271, 0.0
    %v433 = vmin.f32 %v275, 0.0
    %v434 = vmin.f32 %v277, 0.0
    %v435 = vmin.f32 %v281, 0.0
    %v436 = vmin.f32 %v283, 0.0
    %v437 = vmin.f32 %v287, 0.0
    %v438 = vmin.f32 %v289, 0.0
    %v439 = vmin.f32 %v293, 0.0
    %v440 = vmin.f32 %v295, 0.0
    %v441 = vmin.f32 %v299, 0.0
    %v442 = vmin.f32 %v301, 0.0
    %v443 = vmin.f32 %v305, 0.0
    %v444 = vmin.f32 %v307, 0.0
    %v445 = vmin.f32 %v311, 0.0
    %v446 = vmin.f32 %v313, 0.0
    %v447 = vmin.f32 %v317, 0.0
    %v448 = vmin.f32 %v319, 0.0
    %v449 = vmin.f32 %v323, 0.0
    %v450 = vmin.f32 %v325, 0.0
    %v451 = vmin.f32 %v329, 0.0
    %v452 = vmin.f32 %v331, 0.0
    %v453 = vmin.f32 %v335, 0.0
    %v454 = vmin.f32 %v337, 0.0
    %v455 = vmin.f32 %v341, 0.0
    %v456 = vmin.f32 %v343, 0.0
    %v457 = vmin.f32 %v347, 0.0
    %v458 = vmin.f32 %v349, 0.0
    %v459 = vmin.f32 %v353, 0.0
    %v460 = vmin.f32 %v355, 0.0
    %v461 = vmin.f32 %v359, 0.0
    %v462 = vmin.f32 %v361, 0.0
    %v463 = vmin.f32 %v365, 0.0
    %v464 = vmin.f32 %v367, 0.0
    %v465 = vmin.f32 %v371, 0.0
    %v466 = vmin.f32 %v373, 0.0
    %v467 = vmin.f32 %v377, 0.0
    %v468 = vmin.f32 %v379, 0.0
    %v469 = vmin.f32 %v383, 0.0
    %v470 = vmin.f32 %v385, 0.0
    %v471 = vmin.f32 %v389, 0.0
    %v472 = vmin.f32 %v391, 0.0
    %v473 = vmin.f32 %v395, 0.0
    %v474 = vmin.f32 %v397, 0.0
    %v475 = vmin.f32 %v401, 0.0
    %v476 = vmin.f32 %v403, 0.0
    %v477 = vmin.f32 %v407, 0.0
    %v478 = vmin.f32 %v409, 0.0
    %v479 = vmin.f32 %v413, 0.0
    %v480 = vmin.f32 %v415, 0.0
    %v481 = vmul.f32 %v417, 1.442695
    %v482 = vpow.pop %v481
    %v483 = vmul.f32 %v418, 1.442695
    %v484 = vpow.pop %v483
    %v485 = vmul.f32 %v419, 1.442695
    %v486 = vpow.pop %v485
    %v487 = vmul.f32 %v420, 1.442695
    %v488 = vpow.pop %v487
    %v489 = vmul.f32 %v421, 1.442695
    %v490 = vpow.pop %v489
    %v491 = vmul.f32 %v422, 1.442695
    %v492 = vpow.pop %v491
    %v493 = vmul.f32 %v423, 1.442695
    %v494 = vpow.pop %v493
    %v495 = vmul.f32 %v424, 1.442695
    %v496 = vpow.pop %v495
    %v497 = vmul.f32 %v425, 1.442695
    %v498 = vpow.pop %v497
    %v499 = vmul.f32 %v426, 1.442695
    %v500 = vpow.pop %v499
    %v501 = vmul.f32 %v427, 1.442695
    %v502 = vpow.pop %v501
    %v503 = vmul.f32 %v428, 1.442695
    %v504 = vpow.pop %v503
    %v505 = vmul.f32 %v429, 1.442695
    %v506 = vpow.pop %v505
    %v507 = vmul.f32 %v430, 1.442695
    %v508 = vpow.pop %v507
    %v509 = vmul.f32 %v431, 1.442695
    %v510 = vpow.pop %v509
    %v511 = vmul.f32 %v432, 1.442695
    %v512 = vpow.pop %v511
    %v513 = vmul.f32 %v433, 1.442695
    %v514 = vpow.pop %v513
    %v515 = vmul.f32 %v434, 1.442695
    %v516 = vpow.pop %v515
    %v517 = vmul.f32 %v435, 1.442695
    %v518 = vpow.pop %v517
    %v519 = vmul.f32 %v436, 1.442695
    %v520 = vpow.pop %v519
    %v521 = vmul.f32 %v437, 1.442695
    %v522 = vpow.pop %v521
    %v523 = vmul.f32 %v438, 1.442695
    %v524 = vpow.pop %v523
    %v525 = vmul.f32 %v439, 1.442695
    %v526 = vpow.pop %v525
    %v527 = vmul.f32 %v440, 1.442695
    %v528 = vpow.pop %v527
    %v529 = vmul.f32 %v441, 1.442695
    %v530 = vpow.pop %v529
    %v531 = vmul.f32 %v442, 1.442695
    %v532 = vpow.pop %v531
    %v533 = vmul.f32 %v443, 1.442695
    %v534 = vpow.pop %v533
    %v535 = vmul.f32 %v444, 1.442695
    %v536 = vpow.pop %v535
    %v537 = vmul.f32 %v445, 1.442695
    %v538 = vpow.pop %v537
    %v539 = vmul.f32 %v446, 1.442695
    %v540 = vpow.pop %v539
    %v541 = vmul.f32 %v447, 1.442695
    %v542 = vpow.pop %v541
    %v543 = vmul.f32 %v448, 1.442695
    %v544 = vpow.pop %v543
    %v545 = vmul.f32 %v449, 1.442695
    %v546 = vpow.pop %v545
    %v547 = vmul.f32 %v450, 1.442695
    %v548 = vpow.pop %v547
    %v549 = vmul.f32 %v451, 1.442695
    %v550 = vpow.pop %v549
    %v551 = vmul.f32 %v452, 1.442695
    %v552 = vpow.pop %v551
    %v553 = vmul.f32 %v453, 1.442695
    %v554 = vpow.pop %v553
    %v555 = vmul.f32 %v454, 1.442695
    %v556 = vpow.pop %v555
    %v557 = vmul.f32 %v455, 1.442695
    %v558 = vpow.pop %v557
    %v559 = vmul.f32 %v456, 1.442695
    %v560 = vpow.pop %v559
    %v561 = vmul.f32 %v457, 1.442695
    %v562 = vpow.pop %v561
    %v563 = vmul.f32 %v458, 1.442695
    %v564 = vpow.pop %v563
    %v565 = vmul.f32 %v459, 1.442695
    %v566 = vpow.pop %v565
    %v567 = vmul.f32 %v460, 1.442695
    %v568 = vpow.pop %v567
    %v569 = vmul.f32 %v461, 1.442695
    %v570 = vpow.pop %v569
    %v571 = vmul.f32 %v462, 1.442695
    %v572 = vpow.pop %v571
    %v573 = vmul.f32 %v463, 1.442695
    %v574 = vpow.pop %v573
    %v575 = vmul.f32 %v464, 1.442695
    %v576 = vpow.pop %v575
    %v577 = vmul.f32 %v465, 1.442695
    %v578 = vpow.pop %v577
    %v579 = vmul.f32 %v466, 1.442695
    %v580 = vpow.pop %v579
    %v581 = vmul.f32 %v467, 1.442695
    %v582 = vpow.pop %v581
    %v583 = vmul.f32 %v468, 1.442695
    %v584 = vpow.pop %v583
    %v585 = vmul.f32 %v469, 1.442695
    %v586 = vpow.pop %v585
    %v587 = vmul.f32 %v470, 1.442695
    %v588 = vpow.pop %v587
    %v589 = vmul.f32 %v471, 1.442695
    %v590 = vpow.pop %v589
    %v591 = vmul.f32 %v472, 1.442695
    %v592 = vpow.pop %v591
    %v593 = vmul.f32 %v473, 1.442695
    %v594 = vpow.pop %v593
    %v595 = vmul.f32 %v474, 1.442695
    %v596 = vpow.pop %v595
    %v597 = vmul.f32 %v475, 1.442695
    %v598 = vpow.pop %v597
    %v599 = vmul.f32 %v476, 1.442695
    %v600 = vpow.pop %v599
    %v601 = vmul.f32 %v477, 1.442695
    %v602 = vpow.pop %v601
    %v603 = vmul.f32 %v478, 1.442695
    %v604 = vpow.pop %v603
    %v605 = vmul.f32 %v479, 1.442695
    %v606 = vpow.pop %v605
    %v607 = vmul.f32 %v480, 1.442695
    %v608 = vpow.pop %v607
    %v609 = vsub.f32 %v482, 1.0
    %v610 = vsub.f32 %v484, 1.0
    %v611 = vsub.f32 %v486, 1.0
    %v612 = vsub.f32 %v488, 1.0
    %v613 = vsub.f32 %v490, 1.0
    %v614 = vsub.f32 %v492, 1.0
    %v615 = vsub.f32 %v494, 1.0
    %v616 = vsub.f32 %v496, 1.0
    %v617 = vsub.f32 %v498, 1.0
    %v618 = vsub.f32 %v500, 1.0
    %v619 = vsub.f32 %v502, 1.0
    %v620 = vsub.f32 %v504, 1.0
    %v621 = vsub.f32 %v506, 1.0
    %v622 = vsub.f32 %v508, 1.0
    %v623 = vsub.f32 %v510, 1.0
    %v624 = vsub.f32 %v512, 1.0
    %v625 = vsub.f32 %v514, 1.0
    %v626 = vsub.f32 %v516, 1.0
    %v627 = vsub.f32 %v518, 1.0
    %v628 = vsub.f32 %v520, 1.0
    %v629 = vsub.f32 %v522, 1.0
    %v630 = vsub.f32 %v524, 1.0
    %v631 = vsub.f32 %v526, 1.0
    %v632 = vsub.f32 %v528, 1.0
    %v633 = vsub.f32 %v530, 1.0
    %v634 = vsub.f32 %v532, 1.0
    %v635 = vsub.f32 %v534, 1.0
    %v636 = vsub.f32 %v536, 1.0
    %v637 = vsub.f32 %v538, 1.0
    %v638 = vsub.f32 %v540, 1.0
    %v639 = vsub.f32 %v542, 1.0
    %v640 = vsub.f32 %v544, 1.0
    %v641 = vsub.f32 %v546, 1.0
    %v642 = vsub.f32 %v548, 1.0
    %v643 = vsub.f32 %v550, 1.0
    %v644 = vsub.f32 %v552, 1.0
    %v645 = vsub.f32 %v554, 1.0
    %v646 = vsub.f32 %v556, 1.0
    %v647 = vsub.f32 %v558, 1.0
    %v648 = vsub.f32 %v560, 1.0
    %v649 = vsub.f32 %v562, 1.0
    %v650 = vsub.f32 %v564, 1.0
    %v651 = vsub.f32 %v566, 1.0
    %v652 = vsub.f32 %v568, 1.0
    %v653 = vsub.f32 %v570, 1.0
    %v654 = vsub.f32 %v572, 1.0
    %v655 = vsub.f32 %v574, 1.0
    %v656 = vsub.f32 %v576, 1.0
    %v657 = vsub.f32 %v578, 1.0
    %v658 = vsub.f32 %v580, 1.0
    %v659 = vsub.f32 %v582, 1.0
    %v660 = vsub.f32 %v584, 1.0
    %v661 = vsub.f32 %v586, 1.0
    %v662 = vsub.f32 %v588, 1.0
    %v663 = vsub.f32 %v590, 1.0
    %v664 = vsub.f32 %v592, 1.0
    %v665 = vsub.f32 %v594, 1.0
    %v666 = vsub.f32 %v596, 1.0
    %v667 = vsub.f32 %v598, 1.0
    %v668 = vsub.f32 %v600, 1.0
    %v669 = vsub.f32 %v602, 1.0
    %v670 = vsub.f32 %v604, 1.0
    %v671 = vsub.f32 %v606, 1.0
    %v672 = vsub.f32 %v608, 1.0
    %vm673 = vcmp.gt.f32.partialorder %v227, 0.0
    %vm674 = vcmp.gt.f32.partialorder %v229, 0.0
    %vm675 = vcmp.gt.f32.partialorder %v233, 0.0
    %vm676 = vcmp.gt.f32.partialorder %v235, 0.0
    %vm677 = vcmp.gt.f32.partialorder %v239, 0.0
    %vm678 = vcmp.gt.f32.partialorder %v241, 0.0
    %vm679 = vcmp.gt.f32.partialorder %v245, 0.0
    %vm680 = vcmp.gt.f32.partialorder %v247, 0.0
    %vm681 = vcmp.gt.f32.partialorder %v251, 0.0
    %vm682 = vcmp.gt.f32.partialorder %v253, 0.0
    %vm683 = vcmp.gt.f32.partialorder %v257, 0.0
    %vm684 = vcmp.gt.f32.partialorder %v259, 0.0
    %vm685 = vcmp.gt.f32.partialorder %v263, 0.0
    %vm686 = vcmp.gt.f32.partialorder %v265, 0.0
    %vm687 = vcmp.gt.f32.partialorder %v269, 0.0
    %vm688 = vcmp.gt.f32.partialorder %v271, 0.0
    %vm689 = vcmp.gt.f32.partialorder %v275, 0.0
    %vm690 = vcmp.gt.f32.partialorder %v277, 0.0
    %vm691 = vcmp.gt.f32.partialorder %v281, 0.0
    %vm692 = vcmp.gt.f32.partialorder %v283, 0.0
    %vm693 = vcmp.gt.f32.partialorder %v287, 0.0
    %vm694 = vcmp.gt.f32.partialorder %v289, 0.0
    %vm695 = vcmp.gt.f32.partialorder %v293, 0.0
    %vm696 = vcmp.gt.f32.partialorder %v295, 0.0
    %vm697 = vcmp.gt.f32.partialorder %v299, 0.0
    %vm698 = vcmp.gt.f32.partialorder %v301, 0.0
    %vm699 = vcmp.gt.f32.partialorder %v305, 0.0
    %vm700 = vcmp.gt.f32.partialorder %v307, 0.0
    %vm701 = vcmp.gt.f32.partialorder %v311, 0.0
    %vm702 = vcmp.gt.f32.partialorder %v313, 0.0
    %vm703 = vcmp.gt.f32.partialorder %v317, 0.0
    %vm704 = vcmp.gt.f32.partialorder %v319, 0.0
    %vm705 = vcmp.gt.f32.partialorder %v323, 0.0
    %vm706 = vcmp.gt.f32.partialorder %v325, 0.0
    %vm707 = vcmp.gt.f32.partialorder %v329, 0.0
    %vm708 = vcmp.gt.f32.partialorder %v331, 0.0
    %vm709 = vcmp.gt.f32.partialorder %v335, 0.0
    %vm710 = vcmp.gt.f32.partialorder %v337, 0.0
    %vm711 = vcmp.gt.f32.partialorder %v341, 0.0
    %vm712 = vcmp.gt.f32.partialorder %v343, 0.0
    %vm713 = vcmp.gt.f32.partialorder %v347, 0.0
    %vm714 = vcmp.gt.f32.partialorder %v349, 0.0
    %vm715 = vcmp.gt.f32.partialorder %v353, 0.0
    %vm716 = vcmp.gt.f32.partialorder %v355, 0.0
    %vm717 = vcmp.gt.f32.partialorder %v359, 0.0
    %vm718 = vcmp.gt.f32.partialorder %v361, 0.0
    %vm719 = vcmp.gt.f32.partialorder %v365, 0.0
    %vm720 = vcmp.gt.f32.partialorder %v367, 0.0
    %vm721 = vcmp.gt.f32.partialorder %v371, 0.0
    %vm722 = vcmp.gt.f32.partialorder %v373, 0.0
    %vm723 = vcmp.gt.f32.partialorder %v377, 0.0
    %vm724 = vcmp.gt.f32.partialorder %v379, 0.0
    %vm725 = vcmp.gt.f32.partialorder %v383, 0.0
    %vm726 = vcmp.gt.f32.partialorder %v385, 0.0
    %vm727 = vcmp.gt.f32.partialorder %v389, 0.0
    %vm728 = vcmp.gt.f32.partialorder %v391, 0.0
    %vm729 = vcmp.gt.f32.partialorder %v395, 0.0
    %vm730 = vcmp.gt.f32.partialorder %v397, 0.0
    %vm731 = vcmp.gt.f32.partialorder %v401, 0.0
    %vm732 = vcmp.gt.f32.partialorder %v403, 0.0
    %vm733 = vcmp.gt.f32.partialorder %v407, 0.0
    %vm734 = vcmp.gt.f32.partialorder %v409, 0.0
    %vm735 = vcmp.gt.f32.partialorder %v413, 0.0
    %vm736 = vcmp.gt.f32.partialorder %v415, 0.0
    %v737 = vsel %vm673, %v227, %v609
    %v738 = vsel %vm674, %v229, %v610
    %v739 = vsel %vm675, %v233, %v611
    %v740 = vsel %vm676, %v235, %v612
    %v741 = vsel %vm677, %v239, %v613
    %v742 = vsel %vm678, %v241, %v614
    %v743 = vsel %vm679, %v245, %v615
    %v744 = vsel %vm680, %v247, %v616
    %v745 = vsel %vm681, %v251, %v617
    %v746 = vsel %vm682, %v253, %v618
    %v747 = vsel %vm683, %v257, %v619
    %v748 = vsel %vm684, %v259, %v620
    %v749 = vsel %vm685, %v263, %v621
    %v750 = vsel %vm686, %v265, %v622
    %v751 = vsel %vm687, %v269, %v623
    %v752 = vsel %vm688, %v271, %v624
    %v753 = vsel %vm689, %v275, %v625
    %v754 = vsel %vm690, %v277, %v626
    %v755 = vsel %vm691, %v281, %v627
    %v756 = vsel %vm692, %v283, %v628
    %v757 = vsel %vm693, %v287, %v629
    %v758 = vsel %vm694, %v289, %v630
    %v759 = vsel %vm695, %v293, %v631
    %v760 = vsel %vm696, %v295, %v632
    %v761 = vsel %vm697, %v299, %v633
    %v762 = vsel %vm698, %v301, %v634
    %v763 = vsel %vm699, %v305, %v635
    %v764 = vsel %vm700, %v307, %v636
    %v765 = vsel %vm701, %v311, %v637
    %v766 = vsel %vm702, %v313, %v638
    %v767 = vsel %vm703, %v317, %v639
    %v768 = vsel %vm704, %v319, %v640
    %v769 = vsel %vm705, %v323, %v641
    %v770 = vsel %vm706, %v325, %v642
    %v771 = vsel %vm707, %v329, %v643
    %v772 = vsel %vm708, %v331, %v644
    %v773 = vsel %vm709, %v335, %v645
    %v774 = vsel %vm710, %v337, %v646
    %v775 = vsel %vm711, %v341, %v647
    %v776 = vsel %vm712, %v343, %v648
    %v777 = vsel %vm713, %v347, %v649
    %v778 = vsel %vm714, %v349, %v650
    %v779 = vsel %vm715, %v353, %v651
    %v780 = vsel %vm716, %v355, %v652
    %v781 = vsel %vm717, %v359, %v653
    %v782 = vsel %vm718, %v361, %v654
    %v783 = vsel %vm719, %v365, %v655
    %v784 = vsel %vm720, %v367, %v656
    %v785 = vsel %vm721, %v371, %v657
    %v786 = vsel %vm722, %v373, %v658
    %v787 = vsel %vm723, %v377, %v659
    %v788 = vsel %vm724, %v379, %v660
    %v789 = vsel %vm725, %v383, %v661
    %v790 = vsel %vm726, %v385, %v662
    %v791 = vsel %vm727, %v389, %v663
    %v792 = vsel %vm728, %v391, %v664
    %v793 = vsel %vm729, %v395, %v665
    %v794 = vsel %vm730, %v397, %v666
    %v795 = vsel %vm731, %v401, %v667
    %v796 = vsel %vm732, %v403, %v668
    %v797 = vsel %vm733, %v407, %v669
    %v798 = vsel %vm734, %v409, %v670
    %v799 = vsel %vm735, %v413, %v671
    %v800 = vsel %vm736, %v415, %v672
    %801 = vst [vmem:[#allocation2] sm:$0xff] %v737
    %802 = vst [vmem:[#allocation2 + $0x8] sm:$0xff] %v738
    %803 = vst [vmem:[#allocation2 + $0x10] sm:$0xff] %v739
    %804 = vst [vmem:[#allocation2 + $0x18] sm:$0xff] %v740
    %805 = vst [vmem:[#allocation2 + $0x20] sm:$0xff] %v741
    %806 = vst [vmem:[#allocation2 + $0x28] sm:$0xff] %v742
    %807 = vst [vmem:[#allocation2 + $0x30] sm:$0xff] %v743
    %808 = vst [vmem:[#allocation2 + $0x38] sm:$0xff] %v744
    %809 = vst [vmem:[#allocation2 + $0x40] sm:$0xff] %v745
    %810 = vst [vmem:[#allocation2 + $0x48] sm:$0xff] %v746
    %811 = vst [vmem:[#allocation2 + $0x50] sm:$0xff] %v747
    %812 = vst [vmem:[#allocation2 + $0x58] sm:$0xff] %v748
    %813 = vst [vmem:[#allocation2 + $0x60] sm:$0xff] %v749
    %814 = vst [vmem:[#allocation2 + $0x68] sm:$0xff] %v750
    %815 = vst [vmem:[#allocation2 + $0x70] sm:$0xff] %v751
    %816 = vst [vmem:[#allocation2 + $0x78] sm:$0xff] %v752
    %817 = vst [vmem:[#allocation2 + $0x80] sm:$0xff] %v753
    %818 = vst [vmem:[#allocation2 + $0x88] sm:$0xff] %v754
    %819 = vst [vmem:[#allocation2 + $0x90] sm:$0xff] %v755
    %820 = vst [vmem:[#allocation2 + $0x98] sm:$0xff] %v756
    %821 = vst [vmem:[#allocation2 + $0xa0] sm:$0xff] %v757
    %822 = vst [vmem:[#allocation2 + $0xa8] sm:$0xff] %v758
    %823 = vst [vmem:[#allocation2 + $0xb0] sm:$0xff] %v759
    %824 = vst [vmem:[#allocation2 + $0xb8] sm:$0xff] %v760
    %825 = vst [vmem:[#allocation2 + $0xc0] sm:$0xff] %v761
    %826 = vst [vmem:[#allocation2 + $0xc8] sm:$0xff] %v762
    %827 = vst [vmem:[#allocation2 + $0xd0] sm:$0xff] %v763
    %828 = vst [vmem:[#allocation2 + $0xd8] sm:$0xff] %v764
    %829 = vst [vmem:[#allocation2 + $0xe0] sm:$0xff] %v765
    %830 = vst [vmem:[#allocation2 + $0xe8] sm:$0xff] %v766
    %831 = vst [vmem:[#allocation2 + $0xf0] sm:$0xff] %v767
    %832 = vst [vmem:[#allocation2 + $0xf8] sm:$0xff] %v768
    %833 = vst [vmem:[#allocation2 + $0x100] sm:$0xff] %v769
    %834 = vst [vmem:[#allocation2 + $0x108] sm:$0xff] %v770
    %835 = vst [vmem:[#allocation2 + $0x110] sm:$0xff] %v771
    %836 = vst [vmem:[#allocation2 + $0x118] sm:$0xff] %v772
    %837 = vst [vmem:[#allocation2 + $0x120] sm:$0xff] %v773
    %838 = vst [vmem:[#allocation2 + $0x128] sm:$0xff] %v774
    %839 = vst [vmem:[#allocation2 + $0x130] sm:$0xff] %v775
    %840 = vst [vmem:[#allocation2 + $0x138] sm:$0xff] %v776
    %841 = vst [vmem:[#allocation2 + $0x140] sm:$0xff] %v777
    %842 = vst [vmem:[#allocation2 + $0x148] sm:$0xff] %v778
    %843 = vst [vmem:[#allocation2 + $0x150] sm:$0xff] %v779
    %844 = vst [vmem:[#allocation2 + $0x158] sm:$0xff] %v780
    %845 = vst [vmem:[#allocation2 + $0x160] sm:$0xff] %v781
    %846 = vst [vmem:[#allocation2 + $0x168] sm:$0xff] %v782
    %847 = vst [vmem:[#allocation2 + $0x170] sm:$0xff] %v783
    %848 = vst [vmem:[#allocation2 + $0x178] sm:$0xff] %v784
    %849 = vst [vmem:[#allocation2 + $0x180] sm:$0xff] %v785
    %850 = vst [vmem:[#allocation2 + $0x188] sm:$0xff] %v786
    %851 = vst [vmem:[#allocation2 + $0x190] sm:$0xff] %v787
    %852 = vst [vmem:[#allocation2 + $0x198] sm:$0xff] %v788
    %853 = vst [vmem:[#allocation2 + $0x1a0] sm:$0xff] %v789
    %854 = vst [vmem:[#allocation2 + $0x1a8] sm:$0xff] %v790
    %855 = vst [vmem:[#allocation2 + $0x1b0] sm:$0xff] %v791
    %856 = vst [vmem:[#allocation2 + $0x1b8] sm:$0xff] %v792
    %857 = vst [vmem:[#allocation2 + $0x1c0] sm:$0xff] %v793
    %858 = vst [vmem:[#allocation2 + $0x1c8] sm:$0xff] %v794
    %859 = vst [vmem:[#allocation2 + $0x1d0] sm:$0xff] %v795
    %860 = vst [vmem:[#allocation2 + $0x1d8] sm:$0xff] %v796
    %861 = vst [vmem:[#allocation2 + $0x1e0] sm:$0xff] %v797
    %862 = vst [vmem:[#allocation2 + $0x1e8] sm:$0xff] %v798
    %863 = vst [vmem:[#allocation2 + $0x1f0] sm:$0xff] %v799
    %864 = vst [vmem:[#allocation2 + $0x1f8] sm:$0xff] %v800
    // Predicated region
    $region14: #{tpu_custom_call.1} parent=1 // pred_check
      _
    $region15: #{tpu_custom_call.1} parent=1 // pred_check_branch
      %866 = sbr.rel (0) target = $region17
    $region16: #{tpu_custom_call.1} parent=1 // pred_region
      %s868 = ssub.s32 8192, 8192
      %869 = vsyncadd [#allocation3], %s868
      %s870 = sshll.u32 [#allocation2], 4
      %s871 = int_to_ptr.vmem [resolvable:$true] %s870
      %876 = dma.vmem_to_hbm [thread:$0]  %s871, 8192, %s3, [#allocation3], 256, 256, 16
    $region17: #{tpu_custom_call.1} parent=1 // pred_fallthru
      _
    // Predicated region
    $region18: #{tpu_custom_call.1} parent=1 // pred_check
      _
    $region19: #{tpu_custom_call.1} parent=1 // pred_check_branch
      %878 = sbr.rel (0) target = $region21
    $region20: #{tpu_custom_call.1} parent=1 // pred_region
      %879 = dma.done [#allocation3], 8192
    $region21: #{tpu_custom_call.1} parent=1 // pred_fallthru
      _
    %880 = vsyncpa [#allocation3], 1

</llo_original>
